<compile_context>
chip_gen: v7x
topology: tpu7x:2x2x1
jax: 0.10.0
libtpu: 0.0.40
codegen_flags: <defaults>
</compile_context>

<pallas_src>
import numpy as np
import jax
import jax.numpy as jnp
from jax.experimental import pallas as pl
from jax.experimental.pallas import tpu as pltpu


def _sinusoidal_pe(L, E):
    pos = np.arange(L, dtype=np.float32)[:, None]
    div = np.exp(np.arange(0, E, 2, dtype=np.float32) * (-np.log(10000.0) / E))
    pe = np.zeros((L, E), dtype=np.float32)
    pe[:, 0::2] = np.sin(pos * div)
    pe[:, 1::2] = np.cos(pos * div)
    return jnp.asarray(pe)


# --------------------------------------------------------------------------
# Kernel 1: embedding + GRU input projections (row-tiled over B*L, parallel)
# --------------------------------------------------------------------------
def _embed_proj_kernel(xp_ref, xc_ref, xn_ref, pos_ref,
                       wcp_ref, wcc_ref, wcn_ref,
                       wif_ref, bif_ref, wib_ref, bib_ref,
                       gif_ref, gib_ref):
    # circular Conv1d(kernel=3, no bias) as 3 matmuls on pre-rolled row blocks
    emb = (jnp.dot(xp_ref[...], wcp_ref[...], preferred_element_type=jnp.float32)
           + jnp.dot(xc_ref[...], wcc_ref[...], preferred_element_type=jnp.float32)
           + jnp.dot(xn_ref[...], wcn_ref[...], preferred_element_type=jnp.float32)
           + pos_ref[...])
    # TODO(synk): DataEmbedding_ED definition is not in the spec; implemented as
    # circular-conv token embedding + sinusoidal positional embedding, dropout
    # omitted (inference mode identity).
    emb_m = emb.astype(wif_ref.dtype)
    gif_ref[...] = (jnp.dot(emb_m, wif_ref[...],
                            preferred_element_type=jnp.float32) + bif_ref[...])
    gib_ref[...] = (jnp.dot(emb_m, wib_ref[...],
                            preferred_element_type=jnp.float32) + bib_ref[...])


# --------------------------------------------------------------------------
# Kernel 2: bidirectional GRU recurrence + fc/tanh (batch-tiled, parallel)
# --------------------------------------------------------------------------
def _gru_kernel(gif_ref, gib_ref,
                whf_ref, bhf_ref, whb_ref, bhb_ref,
                wff_ref, wfb_ref, bfc_ref,
                outf_ref, outb_ref, hid_ref):
    L, TB, G = gif_ref.shape
    H = G // 3
    unroll = L <= 16

    # hoist weight / bias loads out of the recurrence loops
    whf = whf_ref[...]
    bhf = bhf_ref[...]
    whb = whb_ref[...]
    bhb = bhb_ref[...]

    def cell(h, gi, wh, bh):
        gh = jnp.dot(h.astype(wh.dtype), wh,
                     preferred_element_type=jnp.float32) + bh
        r = jax.nn.sigmoid(gi[:, 0:H] + gh[:, 0:H])
        z = jax.nn.sigmoid(gi[:, H:2 * H] + gh[:, H:2 * H])
        n = jnp.tanh(gi[:, 2 * H:3 * H] + r * gh[:, 2 * H:3 * H])
        return (1.0 - z) * n + z * h

    def _fori(body, init):
        if unroll:
            return jax.lax.fori_loop(0, L, body, init, unroll=True)
        return jax.lax.fori_loop(0, L, body, init)

    h0 = jnp.zeros((TB, H), jnp.float32)

    def fwd_body(t, h):
        h_new = cell(h, gif_ref[t], whf, bhf)
        outf_ref[t] = h_new.astype(outf_ref.dtype)
        return h_new

    h_f = _fori(fwd_body, h0)

    def bwd_body(i, h):
        t = L - 1 - i
        h_new = cell(h, gib_ref[t], whb, bhb)
        outb_ref[t] = h_new.astype(outb_ref.dtype)
        return h_new

    h_b = _fori(bwd_body, h0)

    # hidden = tanh(fc(cat(h_fwd, h_bwd))): concat-Linear split into 2 matmuls
    hid = (jnp.dot(h_f.astype(wff_ref.dtype), wff_ref[...],
                   preferred_element_type=jnp.float32)
           + jnp.dot(h_b.astype(wfb_ref.dtype), wfb_ref[...],
                     preferred_element_type=jnp.float32)
           + bfc_ref[...])
    hid_ref[...] = jnp.tanh(hid).astype(hid_ref.dtype)


# --------------------------------------------------------------------------
# Wrapper
# --------------------------------------------------------------------------
def encoder_pallas(x, params, *, matmul_dtype=jnp.float32):
    """x: (B, L, enc_in) f32 -> (outputs (B, L, 2*enc_hid), hidden (B, dec_hid))."""
    B, L, C = x.shape
    w_conv = params["w_conv"]                 # (E, C, 3)  torch Conv1d layout
    E = w_conv.shape[0]
    H = params["whh_f"].shape[1]
    D = params["w_fc"].shape[0]
    G = 3 * H
    f32 = jnp.float32
    md = matmul_dtype

    # ---- wrapper-side layout plumbing (free in XLA, keeps kernels copy-free) ----
    xp = jnp.roll(x, 1, axis=1).reshape(B * L, C).astype(md)    # x_{t-1} circular
    xc = x.reshape(B * L, C).astype(md)                          # x_t
    xn = jnp.roll(x, -1, axis=1).reshape(B * L, C).astype(md)   # x_{t+1} circular
    pos_rep = jnp.tile(_sinusoidal_pe(L, E), (B, 1))             # (B*L, E) f32

    wc_p = w_conv[:, :, 0].T.astype(md)       # (C, E) pre-transposed
    wc_c = w_conv[:, :, 1].T.astype(md)
    wc_n = w_conv[:, :, 2].T.astype(md)

    wih_f_t = params["wih_f"].T.astype(md)    # (E, 3H)
    wih_b_t = params["wih_b"].T.astype(md)
    bih_f = params["bih_f"].reshape(1, G).astype(f32)
    bih_b = params["bih_b"].reshape(1, G).astype(f32)

    whh_f_t = params["whh_f"].T.astype(md)    # (H, 3H)
    whh_b_t = params["whh_b"].T.astype(md)
    bhh_f = params["bhh_f"].reshape(1, G).astype(f32)
    bhh_b = params["bhh_b"].reshape(1, G).astype(f32)

    wfc_f_t = params["w_fc"][:, :H].T.astype(md)   # (H, D): acts on fwd hidden
    wfc_b_t = params["w_fc"][:, H:].T.astype(md)   # (H, D): acts on bwd hidden
    bfc = params["b_fc"].reshape(1, D).astype(f32)

    # ---------------- kernel 1: embedding + input projections ----------------
    n_rows = B * L
    TR = n_rows if n_rows <= 256 else 256     # full or multiple of 8
    row_blk = lambda cols: pl.BlockSpec((TR, cols), lambda i: (i, 0))
    full_blk = lambda r, c: pl.BlockSpec((r, c), lambda i: (0, 0))

    k1_flops = 2 * n_rows * (3 * C * E + 2 * E * G)
    k1_bytes = 4 * (3 * n_rows * C + n_rows * E + 3 * C * E
                    + 2 * (E + 1) * G + 2 * n_rows * G)
    gif, gib = pl.pallas_call(
        _embed_proj_kernel,
        out_shape=(jax.ShapeDtypeStruct((n_rows, G), f32),
                   jax.ShapeDtypeStruct((n_rows, G), f32)),
        grid_spec=pltpu.PrefetchScalarGridSpec(
            num_scalar_prefetch=0,
            grid=(pl.cdiv(n_rows, TR),),
            in_specs=[row_blk(C), row_blk(C), row_blk(C), row_blk(E),
                      full_blk(C, E), full_blk(C, E), full_blk(C, E),
                      full_blk(E, G), full_blk(1, G),
                      full_blk(E, G), full_blk(1, G)],
            out_specs=[row_blk(G), row_blk(G)],
        ),
        compiler_params=pltpu.CompilerParams(
            dimension_semantics=("parallel",)),
        cost_estimate=pl.CostEstimate(flops=k1_flops, transcendentals=0,
                                      bytes_accessed=k1_bytes),
    )(xp, xc, xn, pos_rep, wc_p, wc_c, wc_n, wih_f_t, bih_f, wih_b_t, bih_b)

    # time-major (L, B, 3H): recurrence only touches the leading ref axis
    gif_t = gif.reshape(B, L, G).transpose(1, 0, 2)
    gib_t = gib.reshape(B, L, G).transpose(1, 0, 2)

    # ---------------- kernel 2: recurrence + fc/tanh ----------------
    TB = B if B <= 8 else 8
    k2_flops = 2 * (2 * L * B * H * G) + 2 * B * 2 * H * D
    k2_bytes = 4 * (2 * L * B * G + 2 * (H + 1) * G + (2 * H + 1) * D
                    + 2 * L * B * H + B * D)
    out_f, out_b, hidden = pl.pallas_call(
        _gru_kernel,
        out_shape=(jax.ShapeDtypeStruct((L, B, H), f32),
                   jax.ShapeDtypeStruct((L, B, H), f32),
                   jax.ShapeDtypeStruct((B, D), f32)),
        grid_spec=pltpu.PrefetchScalarGridSpec(
            num_scalar_prefetch=0,
            grid=(pl.cdiv(B, TB),),
            in_specs=[
                pl.BlockSpec((L, TB, G), lambda b: (0, b, 0)),
                pl.BlockSpec((L, TB, G), lambda b: (0, b, 0)),
                pl.BlockSpec((H, G), lambda b: (0, 0)),
                pl.BlockSpec((1, G), lambda b: (0, 0)),
                pl.BlockSpec((H, G), lambda b: (0, 0)),
                pl.BlockSpec((1, G), lambda b: (0, 0)),
                pl.BlockSpec((H, D), lambda b: (0, 0)),
                pl.BlockSpec((H, D), lambda b: (0, 0)),
                pl.BlockSpec((1, D), lambda b: (0, 0)),
            ],
            out_specs=[
                pl.BlockSpec((L, TB, H), lambda b: (0, b, 0)),
                pl.BlockSpec((L, TB, H), lambda b: (0, b, 0)),
                pl.BlockSpec((TB, D), lambda b: (b, 0)),
            ],
        ),
        compiler_params=pltpu.CompilerParams(
            dimension_semantics=("parallel",)),
        cost_estimate=pl.CostEstimate(flops=k2_flops,
                                      transcendentals=2 * L * B * G + B * D,
                                      bytes_accessed=k2_bytes),
    )(gif_t, gib_t, whh_f_t, bhh_f, whh_b_t, bhh_b, wfc_f_t, wfc_b_t, bfc)

    outputs = jnp.concatenate([out_f, out_b], axis=-1).transpose(1, 0, 2)
    return outputs, hidden


# --------------------------------------------------------------------------
# Pure-JAX reference (mirror of the PyTorch forward) for verification
# --------------------------------------------------------------------------
def encoder_reference(x, params):
    B, L, C = x.shape
    E = params["w_conv"].shape[0]
    hp = jax.lax.Precision.HIGHEST
    pos = _sinusoidal_pe(L, E)

    xp = jnp.roll(x, 1, axis=1)
    xn = jnp.roll(x, -1, axis=1)
    emb = (jnp.einsum("blc,ec->ble", xp, params["w_conv"][:, :, 0], precision=hp)
           + jnp.einsum("blc,ec->ble", x, params["w_conv"][:, :, 1], precision=hp)
           + jnp.einsum("blc,ec->ble", xn, params["w_conv"][:, :, 2], precision=hp)
           + pos[None])

    def run_dir(seq, wih, whh, bih, bhh):
        H = whh.shape[1]
        gi = jnp.einsum("ble,ge->blg", seq, wih, precision=hp) + bih

        def step(h, gi_t):
            gh = jnp.dot(h, whh.T, precision=hp) + bhh
            r = jax.nn.sigmoid(gi_t[:, :H] + gh[:, :H])
            z = jax.nn.sigmoid(gi_t[:, H:2 * H] + gh[:, H:2 * H])
            n = jnp.tanh(gi_t[:, 2 * H:] + r * gh[:, 2 * H:])
            h_new = (1.0 - z) * n + z * h
            return h_new, h_new

        h_last, hs = jax.lax.scan(step, jnp.zeros((B, H), jnp.float32),
                                  jnp.swapaxes(gi, 0, 1))
        return jnp.swapaxes(hs, 0, 1), h_last

    out_f, h_f = run_dir(emb, params["wih_f"], params["whh_f"],
                         params["bih_f"], params["bhh_f"])
    out_b_rev, h_b = run_dir(emb[:, ::-1], params["wih_b"], params["whh_b"],
                             params["bih_b"], params["bhh_b"])
    out_b = out_b_rev[:, ::-1]
    outputs = jnp.concatenate([out_f, out_b], axis=-1)
    hidden = jnp.tanh(jnp.dot(jnp.concatenate([h_f, h_b], axis=1),
                              params["w_fc"].T, precision=hp) + params["b_fc"])
    return outputs, hidden


if __name__ == "__main__":
    # small shapes consistent with the module
    B, L = 2, 8
    ENC_IN, EMB_DIM, ENC_HID, DEC_HID = 4, 16, 16, 32
    C, E, H, D = ENC_IN, EMB_DIM, ENC_HID, DEC_HID

    key = jax.random.PRNGKey(0)
    ks = jax.random.split(key, 12)

    def u(k, shape, bound):
        return jax.random.uniform(k, shape, jnp.float32, -bound, bound)

    x = jax.random.normal(ks[0], (B, L, C), jnp.float32)

    bg = 1.0 / np.sqrt(H)
    params = dict(
        w_conv=jax.random.normal(ks[1], (E, C, 3), jnp.float32)
        * (1.0 / np.sqrt(3 * C)),
        wih_f=u(ks[2], (3 * H, E), bg), whh_f=u(ks[3], (3 * H, H), bg),
        bih_f=u(ks[4], (3 * H,), bg), bhh_f=u(ks[5], (3 * H,), bg),
        wih_b=u(ks[6], (3 * H, E), bg), whh_b=u(ks[7], (3 * H, H), bg),
        bih_b=u(ks[8], (3 * H,), bg), bhh_b=u(ks[9], (3 * H,), bg),
        w_fc=u(ks[10], (D, 2 * H), 1.0 / np.sqrt(2 * H)),
        b_fc=u(ks[11], (D,), 1.0 / np.sqrt(2 * H)),
    )

    outputs, hidden = encoder_pallas(x, params)
    outputs, hidden = jax.block_until_ready((outputs, hidden))

    ref_out, ref_hid = encoder_reference(x, params)

    assert outputs.shape == (B, L, 2 * H), outputs.shape
    assert hidden.shape == (B, D), hidden.shape
    assert jnp.allclose(outputs, ref_out, atol=1e-4, rtol=1e-4), "outputs mismatch"
    assert jnp.allclose(hidden, ref_hid, atol=1e-4, rtol=1e-4), "hidden mismatch"

    print("KERNEL_OK")
</pallas_src>

<mosaic_0001>
module attributes {stable_mosaic.version = 11 : i64} {
  func.func @_embed_proj_kernel(%arg0: i32, %arg1: memref<16x4xf32, #tpu.memory_space<vmem>>, %arg2: memref<16x4xf32, #tpu.memory_space<vmem>>, %arg3: memref<16x4xf32, #tpu.memory_space<vmem>>, %arg4: memref<16x16xf32, #tpu.memory_space<vmem>>, %arg5: memref<4x16xf32, #tpu.memory_space<vmem>>, %arg6: memref<4x16xf32, #tpu.memory_space<vmem>>, %arg7: memref<4x16xf32, #tpu.memory_space<vmem>>, %arg8: memref<16x48xf32, #tpu.memory_space<vmem>>, %arg9: memref<1x48xf32, #tpu.memory_space<vmem>>, %arg10: memref<16x48xf32, #tpu.memory_space<vmem>>, %arg11: memref<1x48xf32, #tpu.memory_space<vmem>>, %arg12: memref<16x48xf32, #tpu.memory_space<vmem>>, %arg13: memref<16x48xf32, #tpu.memory_space<vmem>>) attributes {dimension_semantics = [#tpu.dimension_semantics<parallel>], iteration_bounds = array<i64: 1>, scalar_prefetch = 0 : i64, scratch_operands = 0 : i64, tpu.core_type = #tpu.core_type<tc>, window_params = [{transform_indices = @transform_0, window_bounds = array<i64: 16, 4>}, {transform_indices = @transform_1, window_bounds = array<i64: 16, 4>}, {transform_indices = @transform_2, window_bounds = array<i64: 16, 4>}, {transform_indices = @transform_3, window_bounds = array<i64: 16, 16>}, {pipeline_mode = #tpu.pipeline_mode<synchronous>, transform_indices = @transform_4, window_bounds = array<i64: 4, 16>}, {pipeline_mode = #tpu.pipeline_mode<synchronous>, transform_indices = @transform_5, window_bounds = array<i64: 4, 16>}, {pipeline_mode = #tpu.pipeline_mode<synchronous>, transform_indices = @transform_6, window_bounds = array<i64: 4, 16>}, {pipeline_mode = #tpu.pipeline_mode<synchronous>, transform_indices = @transform_7, window_bounds = array<i64: 16, 48>}, {pipeline_mode = #tpu.pipeline_mode<synchronous>, transform_indices = @transform_8, window_bounds = array<i64: 1, 48>}, {pipeline_mode = #tpu.pipeline_mode<synchronous>, transform_indices = @transform_9, window_bounds = array<i64: 16, 48>}, {pipeline_mode = #tpu.pipeline_mode<synchronous>, transform_indices = @transform_10, window_bounds = array<i64: 1, 48>}, {transform_indices = @transform_11, window_bounds = array<i64: 16, 48>}, {transform_indices = @transform_12, window_bounds = array<i64: 16, 48>}]} {
    %c0 = arith.constant 0 : index
    %c0_0 = arith.constant 0 : index
    %0 = vector.load %arg1[%c0, %c0_0] : memref<16x4xf32, #tpu.memory_space<vmem>>, vector<16x4xf32>
    %c0_1 = arith.constant 0 : index
    %c0_2 = arith.constant 0 : index
    %1 = vector.load %arg5[%c0_1, %c0_2] : memref<4x16xf32, #tpu.memory_space<vmem>>, vector<4x16xf32>
    %cst = arith.constant dense<0.000000e+00> : vector<16x16xf32>
    %2 = tpu.matmul %0, %1, %cst {dimension_numbers = #tpu.dot_dimension_numbers<[1], [0], [0], [1], [0, 0, 1, 1], [], []>} : vector<16x4xf32>, vector<4x16xf32>, vector<16x16xf32> -> vector<16x16xf32>
    %c0_3 = arith.constant 0 : index
    %c0_4 = arith.constant 0 : index
    %3 = vector.load %arg2[%c0_3, %c0_4] : memref<16x4xf32, #tpu.memory_space<vmem>>, vector<16x4xf32>
    %c0_5 = arith.constant 0 : index
    %c0_6 = arith.constant 0 : index
    %4 = vector.load %arg6[%c0_5, %c0_6] : memref<4x16xf32, #tpu.memory_space<vmem>>, vector<4x16xf32>
    %cst_7 = arith.constant dense<0.000000e+00> : vector<16x16xf32>
    %5 = tpu.matmul %3, %4, %cst_7 {dimension_numbers = #tpu.dot_dimension_numbers<[1], [0], [0], [1], [0, 0, 1, 1], [], []>} : vector<16x4xf32>, vector<4x16xf32>, vector<16x16xf32> -> vector<16x16xf32>
    %6 = arith.addf %2, %5 : vector<16x16xf32>
    %c0_8 = arith.constant 0 : index
    %c0_9 = arith.constant 0 : index
    %7 = vector.load %arg3[%c0_8, %c0_9] : memref<16x4xf32, #tpu.memory_space<vmem>>, vector<16x4xf32>
    %c0_10 = arith.constant 0 : index
    %c0_11 = arith.constant 0 : index
    %8 = vector.load %arg7[%c0_10, %c0_11] : memref<4x16xf32, #tpu.memory_space<vmem>>, vector<4x16xf32>
    %cst_12 = arith.constant dense<0.000000e+00> : vector<16x16xf32>
    %9 = tpu.matmul %7, %8, %cst_12 {dimension_numbers = #tpu.dot_dimension_numbers<[1], [0], [0], [1], [0, 0, 1, 1], [], []>} : vector<16x4xf32>, vector<4x16xf32>, vector<16x16xf32> -> vector<16x16xf32>
    %10 = arith.addf %6, %9 : vector<16x16xf32>
    %c0_13 = arith.constant 0 : index
    %c0_14 = arith.constant 0 : index
    %11 = vector.load %arg4[%c0_13, %c0_14] : memref<16x16xf32, #tpu.memory_space<vmem>>, vector<16x16xf32>
    %12 = arith.addf %10, %11 : vector<16x16xf32>
    %c0_15 = arith.constant 0 : index
    %c0_16 = arith.constant 0 : index
    %13 = vector.load %arg8[%c0_15, %c0_16] : memref<16x48xf32, #tpu.memory_space<vmem>>, vector<16x48xf32>
    %cst_17 = arith.constant dense<0.000000e+00> : vector<16x48xf32>
    %14 = tpu.matmul %12, %13, %cst_17 {dimension_numbers = #tpu.dot_dimension_numbers<[1], [0], [0], [1], [0, 0, 1, 1], [], []>} : vector<16x16xf32>, vector<16x48xf32>, vector<16x48xf32> -> vector<16x48xf32>
    %c0_18 = arith.constant 0 : index
    %c0_19 = arith.constant 0 : index
    %15 = vector.load %arg9[%c0_18, %c0_19] : memref<1x48xf32, #tpu.memory_space<vmem>>, vector<1x48xf32>
    %16 = vector.broadcast %15 : vector<1x48xf32> to vector<16x48xf32>
    %17 = arith.addf %14, %16 : vector<16x48xf32>
    %c0_20 = arith.constant 0 : index
    %c0_21 = arith.constant 0 : index
    %18 = vector.load %arg12[%c0_20, %c0_21] : memref<16x48xf32, #tpu.memory_space<vmem>>, vector<16x48xf32>
    tpu.vector_store %arg12[%c0_20, %c0_21], %17 {strides = array<i32>} : memref<16x48xf32, #tpu.memory_space<vmem>>, vector<16x48xf32>,
    %c0_22 = arith.constant 0 : index
    %c0_23 = arith.constant 0 : index
    %19 = vector.load %arg10[%c0_22, %c0_23] : memref<16x48xf32, #tpu.memory_space<vmem>>, vector<16x48xf32>
    %cst_24 = arith.constant dense<0.000000e+00> : vector<16x48xf32>
    %20 = tpu.matmul %12, %19, %cst_24 {dimension_numbers = #tpu.dot_dimension_numbers<[1], [0], [0], [1], [0, 0, 1, 1], [], []>} : vector<16x16xf32>, vector<16x48xf32>, vector<16x48xf32> -> vector<16x48xf32>
    %c0_25 = arith.constant 0 : index
    %c0_26 = arith.constant 0 : index
    %21 = vector.load %arg11[%c0_25, %c0_26] : memref<1x48xf32, #tpu.memory_space<vmem>>, vector<1x48xf32>
    %22 = vector.broadcast %21 : vector<1x48xf32> to vector<16x48xf32>
    %23 = arith.addf %20, %22 : vector<16x48xf32>
    %c0_27 = arith.constant 0 : index
    %c0_28 = arith.constant 0 : index
    %24 = vector.load %arg13[%c0_27, %c0_28] : memref<16x48xf32, #tpu.memory_space<vmem>>, vector<16x48xf32>
    tpu.vector_store %arg13[%c0_27, %c0_28], %23 {strides = array<i32>} : memref<16x48xf32, #tpu.memory_space<vmem>>, vector<16x48xf32>,
    return
  }
  func.func @transform_0(%arg0: i32) -> (i32, i32) {
    %c0_i32 = arith.constant 0 : i32
    %c0_i32_0 = arith.constant 0 : i32
    return %arg0, %c0_i32 : i32, i32
  }
  func.func @transform_1(%arg0: i32) -> (i32, i32) {
    %c0_i32 = arith.constant 0 : i32
    %c0_i32_0 = arith.constant 0 : i32
    return %arg0, %c0_i32 : i32, i32
  }
  func.func @transform_2(%arg0: i32) -> (i32, i32) {
    %c0_i32 = arith.constant 0 : i32
    %c0_i32_0 = arith.constant 0 : i32
    return %arg0, %c0_i32 : i32, i32
  }
  func.func @transform_3(%arg0: i32) -> (i32, i32) {
    %c0_i32 = arith.constant 0 : i32
    %c0_i32_0 = arith.constant 0 : i32
    return %arg0, %c0_i32 : i32, i32
  }
  func.func @transform_4(%arg0: i32) -> (i32, i32) {
    %c0_i32 = arith.constant 0 : i32
    %c0_i32_0 = arith.constant 0 : i32
    %c0_i32_1 = arith.constant 0 : i32
    return %c0_i32, %c0_i32_0 : i32, i32
  }
  func.func @transform_5(%arg0: i32) -> (i32, i32) {
    %c0_i32 = arith.constant 0 : i32
    %c0_i32_0 = arith.constant 0 : i32
    %c0_i32_1 = arith.constant 0 : i32
    return %c0_i32, %c0_i32_0 : i32, i32
  }
  func.func @transform_6(%arg0: i32) -> (i32, i32) {
    %c0_i32 = arith.constant 0 : i32
    %c0_i32_0 = arith.constant 0 : i32
    %c0_i32_1 = arith.constant 0 : i32
    return %c0_i32, %c0_i32_0 : i32, i32
  }
  func.func @transform_7(%arg0: i32) -> (i32, i32) {
    %c0_i32 = arith.constant 0 : i32
    %c0_i32_0 = arith.constant 0 : i32
    %c0_i32_1 = arith.constant 0 : i32
    return %c0_i32, %c0_i32_0 : i32, i32
  }
  func.func @transform_8(%arg0: i32) -> (i32, i32) {
    %c0_i32 = arith.constant 0 : i32
    %c0_i32_0 = arith.constant 0 : i32
    %c0_i32_1 = arith.constant 0 : i32
    return %c0_i32, %c0_i32_0 : i32, i32
  }
  func.func @transform_9(%arg0: i32) -> (i32, i32) {
    %c0_i32 = arith.constant 0 : i32
    %c0_i32_0 = arith.constant 0 : i32
    %c0_i32_1 = arith.constant 0 : i32
    return %c0_i32, %c0_i32_0 : i32, i32
  }
  func.func @transform_10(%arg0: i32) -> (i32, i32) {
    %c0_i32 = arith.constant 0 : i32
    %c0_i32_0 = arith.constant 0 : i32
    %c0_i32_1 = arith.constant 0 : i32
    return %c0_i32, %c0_i32_0 : i32, i32
  }
  func.func @transform_11(%arg0: i32) -> (i32, i32) {
    %c0_i32 = arith.constant 0 : i32
    %c0_i32_0 = arith.constant 0 : i32
    return %arg0, %c0_i32 : i32, i32
  }
  func.func @transform_12(%arg0: i32) -> (i32, i32) {
    %c0_i32 = arith.constant 0 : i32
    %c0_i32_0 = arith.constant 0 : i32
    return %arg0, %c0_i32 : i32, i32
  }
}

</mosaic_0001>

<llo_original>
// kernel: tpu_custom_call.1
$region0: #{tpu_custom_call.1}
  #allocation0 [shape = 'u32[]', space=smem, size = 0x4, offset = 0x4, fixed_abs, tag = 'smem constant byte address 0x4 - core index']
  #allocation1 [shape = 'u32[144,128]{1,0:T(1,128)}', space=vmem, size = 0x12000, scoped, tag = 'internal scratch']
  %s0 = inlined_call_operand.vmem [shape: f32[16,4], index: 0, kind: input, shape index: {}]
  %s1 = inlined_call_operand.vmem [shape: f32[16,4], index: 1, kind: input, shape index: {}]
  %s2 = inlined_call_operand.vmem [shape: f32[16,4], index: 2, kind: input, shape index: {}]
  %s3 = inlined_call_operand.vmem [shape: f32[16,16], index: 3, kind: input, shape index: {}]
  %s4 = inlined_call_operand.vmem [shape: f32[4,16], index: 4, kind: input, shape index: {}]
  %s5 = inlined_call_operand.vmem [shape: f32[4,16], index: 5, kind: input, shape index: {}]
  %s6 = inlined_call_operand.vmem [shape: f32[4,16], index: 6, kind: input, shape index: {}]
  %s7 = inlined_call_operand.vmem [shape: f32[16,48], index: 7, kind: input, shape index: {}]
  %s8 = inlined_call_operand.vmem [shape: f32[1,48], index: 8, kind: input, shape index: {}]
  %s9 = inlined_call_operand.vmem [shape: f32[16,48], index: 9, kind: input, shape index: {}]
  %s10 = inlined_call_operand.vmem [shape: f32[1,48], index: 10, kind: input, shape index: {}]
  %s11 = inlined_call_operand.hbm [shape: f32[16,48], index: 11, kind: output, shape index: {0}]
  %s12 = inlined_call_operand.hbm [shape: f32[16,48], index: 12, kind: output, shape index: {1}]
  %13 = xla_tuple %s11, %s12
  %s14 = sld [smem:[#allocation0]]
  $region62: #{tpu_custom_call.1} parent=0
    _
  %s16 = ssub.s32 1, %s14
  %s17 = scalar_select 0, %s16, %s14
  $region1: #{tpu_custom_call.1} parent=0
    #allocation2 [shape = 'u8[8192]{0}', space=vmem, size = 0x2000, scoped, tag = 'output window, operand 0, single buffered']
    #allocation3 [shape = 's32[1]{0}', space=sflag, size = 0x4, scoped, tag = 'scoped memory for tpu_custom_call.1']
    #allocation4 [shape = 'u8[8192]{0}', space=vmem, size = 0x2000, scoped, tag = 'output window, operand 1, single buffered']
    #allocation5 [shape = 's32[1]{0}', space=sflag, size = 0x4, scoped, tag = 'scoped memory for tpu_custom_call.1']
    %18 = vsyncpa [#allocation3], 0
    %19 = vsyncpa [#allocation5], 0
    // Predicated region
    $region2: #{tpu_custom_call.1} parent=1 // pred_check
      _
    $region3: #{tpu_custom_call.1} parent=1 // pred_check_branch
      %21 = sbr.rel (0) target = $region5
    $region4: #{tpu_custom_call.1} parent=1 // pred_region
      _
    $region5: #{tpu_custom_call.1} parent=1 // pred_fallthru
      _
    // Predicated region
    $region6: #{tpu_custom_call.1} parent=1 // pred_check
      _
    $region7: #{tpu_custom_call.1} parent=1 // pred_check_branch
      %23 = sbr.rel (0) target = $region9
    $region8: #{tpu_custom_call.1} parent=1 // pred_region
      _
    $region9: #{tpu_custom_call.1} parent=1 // pred_fallthru
      _
    // Predicated region
    $region10: #{tpu_custom_call.1} parent=1 // pred_check
      _
    $region11: #{tpu_custom_call.1} parent=1 // pred_check_branch
      %25 = sbr.rel (0) target = $region13
    $region12: #{tpu_custom_call.1} parent=1 // pred_region
      _
    $region13: #{tpu_custom_call.1} parent=1 // pred_fallthru
      _
    // Predicated region
    $region14: #{tpu_custom_call.1} parent=1 // pred_check
      _
    $region15: #{tpu_custom_call.1} parent=1 // pred_check_branch
      %27 = sbr.rel (0) target = $region17
    $region16: #{tpu_custom_call.1} parent=1 // pred_region
      _
    $region17: #{tpu_custom_call.1} parent=1 // pred_fallthru
      _
    // Predicated region
    $region18: #{tpu_custom_call.1} parent=1 // pred_check
      _
    $region19: #{tpu_custom_call.1} parent=1 // pred_check_branch
      %29 = sbr.rel (0) target = $region21
    $region20: #{tpu_custom_call.1} parent=1 // pred_region
      _
    $region21: #{tpu_custom_call.1} parent=1 // pred_fallthru
      _
    // Predicated region
    $region22: #{tpu_custom_call.1} parent=1 // pred_check
      _
    $region23: #{tpu_custom_call.1} parent=1 // pred_check_branch
      %31 = sbr.rel (0) target = $region25
    $region24: #{tpu_custom_call.1} parent=1 // pred_region
      _
    $region25: #{tpu_custom_call.1} parent=1 // pred_fallthru
      _
    // Predicated region
    $region26: #{tpu_custom_call.1} parent=1 // pred_check
      _
    $region27: #{tpu_custom_call.1} parent=1 // pred_check_branch
      %33 = sbr.rel (0) target = $region29
    $region28: #{tpu_custom_call.1} parent=1 // pred_region
      _
    $region29: #{tpu_custom_call.1} parent=1 // pred_fallthru
      _
    // Predicated region
    $region30: #{tpu_custom_call.1} parent=1 // pred_check
      _
    $region31: #{tpu_custom_call.1} parent=1 // pred_check_branch
      %35 = sbr.rel (0) target = $region33
    $region32: #{tpu_custom_call.1} parent=1 // pred_region
      _
    $region33: #{tpu_custom_call.1} parent=1 // pred_fallthru
      _
    // Predicated region
    $region34: #{tpu_custom_call.1} parent=1 // pred_check
      _
    $region35: #{tpu_custom_call.1} parent=1 // pred_check_branch
      %37 = sbr.rel (0) target = $region37
    $region36: #{tpu_custom_call.1} parent=1 // pred_region
      _
    $region37: #{tpu_custom_call.1} parent=1 // pred_fallthru
      _
    // Predicated region
    $region38: #{tpu_custom_call.1} parent=1 // pred_check
      _
    $region39: #{tpu_custom_call.1} parent=1 // pred_check_branch
      %39 = sbr.rel (0) target = $region41
    $region40: #{tpu_custom_call.1} parent=1 // pred_region
      _
    $region41: #{tpu_custom_call.1} parent=1 // pred_fallthru
      _
    // Predicated region
    $region42: #{tpu_custom_call.1} parent=1 // pred_check
      _
    $region43: #{tpu_custom_call.1} parent=1 // pred_check_branch
      %41 = sbr.rel (0) target = $region45
    $region44: #{tpu_custom_call.1} parent=1 // pred_region
      _
    $region45: #{tpu_custom_call.1} parent=1 // pred_fallthru
      _
    %v42 = vld [vmem:[%s0] sm:$0xff]
    %v43 = vld [vmem:[%s0 + $0x8] sm:$0xff]
    %v44 = vld [vmem:[%s4] sm:$0xf]
    %v45 = vld [vmem:[%s1] sm:$0xff]
    %v46 = vld [vmem:[%s1 + $0x8] sm:$0xff]
    %v47 = vld [vmem:[%s5] sm:$0xf]
    %vm48 = vcmask 31744
    %v50 = vsel %vm48, %v45, 0
    %v53 = vsel %vm48, %v46, 0
    %vm55 = vcmask 1043456
    %v57 = vsel %vm55, %v47, 0
    %59 = vmatprep.subr.mxu0 0.0
    %60 = vmatpush1.msra.mxu0 %v57
    %61 = vmatprep.subr.mxu0 0.0
    %62 = vmatpush1.msra.mxu0 0.0
    %63 = vmatprep.subr.mxu0 0.0
    %64 = vmatpush1.msra.mxu0 0.0
    %65 = vmatprep.subr.mxu0 0.0
    %66 = vmatpush1.msra.mxu0 0.0
    %67 = vmatprep.subr.mxu0 0.0
    %68 = vmatpush1.msra.mxu0 0.0
    %69 = vmatprep.subr.mxu0 0.0
    %70 = vmatpush1.msra.mxu0 0.0
    %71 = vmatprep.subr.mxu0 0.0
    %72 = vmatpush1.msra.mxu0 0.0
    %73 = vmatprep.subr.mxu0 0.0
    %74 = vmatpush1.msra.mxu0 0.0
    %75 = vmatprep.subr.mxu0 0.0
    %76 = vmatpush1.msra.mxu0 0.0
    %77 = vmatprep.subr.mxu0 0.0
    %78 = vmatpush1.msra.mxu0 0.0
    %79 = vmatprep.subr.mxu0 0.0
    %80 = vmatpush1.msra.mxu0 0.0
    %81 = vmatprep.subr.mxu0 0.0
    %82 = vmatpush1.msra.mxu0 0.0
    %83 = vmatprep.subr.mxu0 0.0
    %84 = vmatpush1.msra.mxu0 0.0
    %85 = vmatprep.subr.mxu0 0.0
    %86 = vmatpush1.msra.mxu0 0.0
    %87 = vmatprep.subr.mxu0 0.0
    %88 = vmatpush1.msra.mxu0 0.0
    %89 = vmatprep.subr.mxu0 0.0
    %90 = vmatpush1.msra.mxu0 0.0
    %91 = vmatprep.subr.mxu0 0.0
    %92 = vmatpush1.msra.mxu0 0.0
    %93 = vmatprep.subr.mxu0 0.0
    %94 = vmatpush1.msra.mxu0 0.0
    %95 = vmatprep.subr.mxu0 0.0
    %96 = vmatpush1.msra.mxu0 0.0
    %97 = vmatprep.subr.mxu0 0.0
    %98 = vmatpush1.msra.mxu0 0.0
    %99 = vmatprep.subr.mxu0 0.0
    %100 = vmatpush1.msra.mxu0 0.0
    %101 = vmatprep.subr.mxu0 0.0
    %102 = vmatpush1.msra.mxu0 0.0
    %103 = vmatprep.subr.mxu0 0.0
    %104 = vmatpush1.msra.mxu0 0.0
    %105 = vmatprep.subr.mxu0 0.0
    %106 = vmatpush1.msra.mxu0 0.0
    %107 = vmatprep.subr.mxu0 0.0
    %108 = vmatpush1.msra.mxu0 0.0
    %109 = vmatprep.subr.mxu0 0.0
    %110 = vmatpush1.msra.mxu0 0.0
    %111 = vmatprep.subr.mxu0 0.0
    %112 = vmatpush1.msra.mxu0 0.0
    %113 = vmatprep.subr.mxu0 0.0
    %114 = vmatpush1.msra.mxu0 0.0
    %115 = vmatprep.subr.mxu0 0.0
    %116 = vmatpush1.msra.mxu0 0.0
    %117 = vmatprep.subr.mxu0 0.0
    %118 = vmatpush1.msra.mxu0 0.0
    %119 = vmatprep.subr.mxu0 0.0
    %120 = vmatpush1.msra.mxu0 0.0
    %121 = vmatprep.subr.mxu0 0.0
    %122 = vmatpush1.msra.mxu0 0.0
    %123 = vmatprep.mubr.f32.mxu0 0.0
    %124 = vmatmul.mubr.f32.gmra.mrb[0].mxu0 %v50
    %v125 = vpop.f32.mrb[0].mxu0
    %v126 = vadd.f32 0.0, %v125
    %v127 = vpop.f32.mrb[0].mxu0
    %128 = vmatprep.mubr.f32.mxu0 0.0
    %129 = vmatmul.mubr.f32.gmra.mrb[0].mxu0 %v53
    %v130 = vpop.f32.mrb[0].mxu0
    %v131 = vadd.f32 0.0, %v130
    %v132 = vpop.f32.mrb[0].mxu0
    %133 = vdwg.mxu0
    %v135 = vsel %vm48, %v42, 0
    %v138 = vsel %vm48, %v43, 0
    %v141 = vsel %vm55, %v44, 0
    %143 = vmatprep.subr.mxu0 0.0
    %144 = vmatpush1.msra.mxu0 %v141
    %145 = vmatprep.subr.mxu0 0.0
    %146 = vmatpush1.msra.mxu0 0.0
    %147 = vmatprep.subr.mxu0 0.0
    %148 = vmatpush1.msra.mxu0 0.0
    %149 = vmatprep.subr.mxu0 0.0
    %150 = vmatpush1.msra.mxu0 0.0
    %151 = vmatprep.subr.mxu0 0.0
    %152 = vmatpush1.msra.mxu0 0.0
    %153 = vmatprep.subr.mxu0 0.0
    %154 = vmatpush1.msra.mxu0 0.0
    %155 = vmatprep.subr.mxu0 0.0
    %156 = vmatpush1.msra.mxu0 0.0
    %157 = vmatprep.subr.mxu0 0.0
    %158 = vmatpush1.msra.mxu0 0.0
    %159 = vmatprep.subr.mxu0 0.0
    %160 = vmatpush1.msra.mxu0 0.0
    %161 = vmatprep.subr.mxu0 0.0
    %162 = vmatpush1.msra.mxu0 0.0
    %163 = vmatprep.subr.mxu0 0.0
    %164 = vmatpush1.msra.mxu0 0.0
    %165 = vmatprep.subr.mxu0 0.0
    %166 = vmatpush1.msra.mxu0 0.0
    %167 = vmatprep.subr.mxu0 0.0
    %168 = vmatpush1.msra.mxu0 0.0
    %169 = vmatprep.subr.mxu0 0.0
    %170 = vmatpush1.msra.mxu0 0.0
    %171 = vmatprep.subr.mxu0 0.0
    %172 = vmatpush1.msra.mxu0 0.0
    %173 = vmatprep.subr.mxu0 0.0
    %174 = vmatpush1.msra.mxu0 0.0
    %175 = vmatprep.subr.mxu0 0.0
    %176 = vmatpush1.msra.mxu0 0.0
    %177 = vmatprep.subr.mxu0 0.0
    %178 = vmatpush1.msra.mxu0 0.0
    %179 = vmatprep.subr.mxu0 0.0
    %180 = vmatpush1.msra.mxu0 0.0
    %181 = vmatprep.subr.mxu0 0.0
    %182 = vmatpush1.msra.mxu0 0.0
    %183 = vmatprep.subr.mxu0 0.0
    %184 = vmatpush1.msra.mxu0 0.0
    %185 = vmatprep.subr.mxu0 0.0
    %186 = vmatpush1.msra.mxu0 0.0
    %187 = vmatprep.subr.mxu0 0.0
    %188 = vmatpush1.msra.mxu0 0.0
    %189 = vmatprep.subr.mxu0 0.0
    %190 = vmatpush1.msra.mxu0 0.0
    %191 = vmatprep.subr.mxu0 0.0
    %192 = vmatpush1.msra.mxu0 0.0
    %193 = vmatprep.subr.mxu0 0.0
    %194 = vmatpush1.msra.mxu0 0.0
    %195 = vmatprep.subr.mxu0 0.0
    %196 = vmatpush1.msra.mxu0 0.0
    %197 = vmatprep.subr.mxu0 0.0
    %198 = vmatpush1.msra.mxu0 0.0
    %199 = vmatprep.subr.mxu0 0.0
    %200 = vmatpush1.msra.mxu0 0.0
    %201 = vmatprep.subr.mxu0 0.0
    %202 = vmatpush1.msra.mxu0 0.0
    %203 = vmatprep.subr.mxu0 0.0
    %204 = vmatpush1.msra.mxu0 0.0
    %205 = vmatprep.subr.mxu0 0.0
    %206 = vmatpush1.msra.mxu0 0.0
    %207 = vmatprep.mubr.f32.mxu0 0.0
    %208 = vmatmul.mubr.f32.gmra.mrb[0].mxu0 %v135
    %v209 = vpop.f32.mrb[0].mxu0
    %v210 = vadd.f32 %v126, %v209
    %v211 = vpop.f32.mrb[0].mxu0
    %212 = vmatprep.mubr.f32.mxu0 0.0
    %213 = vmatmul.mubr.f32.gmra.mrb[0].mxu0 %v138
    %v214 = vpop.f32.mrb[0].mxu0
    %v215 = vadd.f32 %v131, %v214
    %v216 = vpop.f32.mrb[0].mxu0
    %217 = vdwg.mxu0
    %v218 = vld [vmem:[%s2] sm:$0xff]
    %v219 = vld [vmem:[%s2 + $0x8] sm:$0xff]
    %v220 = vld [vmem:[%s6] sm:$0xf]
    %v222 = vsel %vm48, %v218, 0
    %v225 = vsel %vm48, %v219, 0
    %v228 = vsel %vm55, %v220, 0
    %230 = vmatprep.subr.mxu0 0.0
    %231 = vmatpush1.msra.mxu0 %v228
    %232 = vmatprep.subr.mxu0 0.0
    %233 = vmatpush1.msra.mxu0 0.0
    %234 = vmatprep.subr.mxu0 0.0
    %235 = vmatpush1.msra.mxu0 0.0
    %236 = vmatprep.subr.mxu0 0.0
    %237 = vmatpush1.msra.mxu0 0.0
    %238 = vmatprep.subr.mxu0 0.0
    %239 = vmatpush1.msra.mxu0 0.0
    %240 = vmatprep.subr.mxu0 0.0
    %241 = vmatpush1.msra.mxu0 0.0
    %242 = vmatprep.subr.mxu0 0.0
    %243 = vmatpush1.msra.mxu0 0.0
    %244 = vmatprep.subr.mxu0 0.0
    %245 = vmatpush1.msra.mxu0 0.0
    %246 = vmatprep.subr.mxu0 0.0
    %247 = vmatpush1.msra.mxu0 0.0
    %248 = vmatprep.subr.mxu0 0.0
    %249 = vmatpush1.msra.mxu0 0.0
    %250 = vmatprep.subr.mxu0 0.0
    %251 = vmatpush1.msra.mxu0 0.0
    %252 = vmatprep.subr.mxu0 0.0
    %253 = vmatpush1.msra.mxu0 0.0
    %254 = vmatprep.subr.mxu0 0.0
    %255 = vmatpush1.msra.mxu0 0.0
    %256 = vmatprep.subr.mxu0 0.0
    %257 = vmatpush1.msra.mxu0 0.0
    %258 = vmatprep.subr.mxu0 0.0
    %259 = vmatpush1.msra.mxu0 0.0
    %260 = vmatprep.subr.mxu0 0.0
    %261 = vmatpush1.msra.mxu0 0.0
    %262 = vmatprep.subr.mxu0 0.0
    %263 = vmatpush1.msra.mxu0 0.0
    %264 = vmatprep.subr.mxu0 0.0
    %265 = vmatpush1.msra.mxu0 0.0
    %266 = vmatprep.subr.mxu0 0.0
    %267 = vmatpush1.msra.mxu0 0.0
    %268 = vmatprep.subr.mxu0 0.0
    %269 = vmatpush1.msra.mxu0 0.0
    %270 = vmatprep.subr.mxu0 0.0
    %271 = vmatpush1.msra.mxu0 0.0
    %272 = vmatprep.subr.mxu0 0.0
    %273 = vmatpush1.msra.mxu0 0.0
    %274 = vmatprep.subr.mxu0 0.0
    %275 = vmatpush1.msra.mxu0 0.0
    %276 = vmatprep.subr.mxu0 0.0
    %277 = vmatpush1.msra.mxu0 0.0
    %278 = vmatprep.subr.mxu0 0.0
    %279 = vmatpush1.msra.mxu0 0.0
    %280 = vmatprep.subr.mxu0 0.0
    %281 = vmatpush1.msra.mxu0 0.0
    %282 = vmatprep.subr.mxu0 0.0
    %283 = vmatpush1.msra.mxu0 0.0
    %284 = vmatprep.subr.mxu0 0.0
    %285 = vmatpush1.msra.mxu0 0.0
    %286 = vmatprep.subr.mxu0 0.0
    %287 = vmatpush1.msra.mxu0 0.0
    %288 = vmatprep.subr.mxu0 0.0
    %289 = vmatpush1.msra.mxu0 0.0
    %290 = vmatprep.subr.mxu0 0.0
    %291 = vmatpush1.msra.mxu0 0.0
    %292 = vmatprep.subr.mxu0 0.0
    %293 = vmatpush1.msra.mxu0 0.0
    %294 = vmatprep.mubr.f32.mxu0 0.0
    %295 = vmatmul.mubr.f32.gmra.mrb[0].mxu0 %v222
    %v296 = vpop.f32.mrb[0].mxu0
    %v297 = vadd.f32 0.0, %v296
    %v298 = vpop.f32.mrb[0].mxu0
    %299 = vmatprep.mubr.f32.mxu0 0.0
    %300 = vmatmul.mubr.f32.gmra.mrb[0].mxu0 %v225
    %v301 = vpop.f32.mrb[0].mxu0
    %v302 = vadd.f32 0.0, %v301
    %v303 = vpop.f32.mrb[0].mxu0
    %304 = vdwg.mxu0
    %v305 = vadd.f32 %v210, %v297
    %v306 = vadd.f32 %v215, %v302
    %v307 = vld [vmem:[%s3] sm:$0xff]
    %v308 = vld [vmem:[%s3 + $0x8] sm:$0xff]
    %v309 = vadd.f32 %v305, %v307
    %v310 = vadd.f32 %v306, %v308
    %v311 = vld [vmem:[%s7] sm:$0xff]
    %v312 = vld [vmem:[%s7 + $0x8] sm:$0xff]
    %v313 = vld [vmem:[%s8] sm:$0x1]
    %v315 = vlaneseq
    %v316 = vshrl.u32 %v315, 7
    %v317 = vsub.s32 0, %v316
    %v318 = vrot.slane %v313, %v317
    %vm320 = vcmask 130048
    %v322 = vsel %vm320, %v309, 0
    %v325 = vsel %vm320, %v310, 0
    %327 = vmatprep.subr.mxu0 0.0
    %328 = vmatpush1.msra.mxu0 %v311
    %329 = vmatprep.subr.mxu0 0.0
    %330 = vmatpush1.msra.mxu0 %v312
    %331 = vmatprep.subr.mxu0 0.0
    %332 = vmatpush1.msra.mxu0 0.0
    %333 = vmatprep.subr.mxu0 0.0
    %334 = vmatpush1.msra.mxu0 0.0
    %335 = vmatprep.subr.mxu0 0.0
    %336 = vmatpush1.msra.mxu0 0.0
    %337 = vmatprep.subr.mxu0 0.0
    %338 = vmatpush1.msra.mxu0 0.0
    %339 = vmatprep.subr.mxu0 0.0
    %340 = vmatpush1.msra.mxu0 0.0
    %341 = vmatprep.subr.mxu0 0.0
    %342 = vmatpush1.msra.mxu0 0.0
    %343 = vmatprep.subr.mxu0 0.0
    %344 = vmatpush1.msra.mxu0 0.0
    %345 = vmatprep.subr.mxu0 0.0
    %346 = vmatpush1.msra.mxu0 0.0
    %347 = vmatprep.subr.mxu0 0.0
    %348 = vmatpush1.msra.mxu0 0.0
    %349 = vmatprep.subr.mxu0 0.0
    %350 = vmatpush1.msra.mxu0 0.0
    %351 = vmatprep.subr.mxu0 0.0
    %352 = vmatpush1.msra.mxu0 0.0
    %353 = vmatprep.subr.mxu0 0.0
    %354 = vmatpush1.msra.mxu0 0.0
    %355 = vmatprep.subr.mxu0 0.0
    %356 = vmatpush1.msra.mxu0 0.0
    %357 = vmatprep.subr.mxu0 0.0
    %358 = vmatpush1.msra.mxu0 0.0
    %359 = vmatprep.subr.mxu0 0.0
    %360 = vmatpush1.msra.mxu0 0.0
    %361 = vmatprep.subr.mxu0 0.0
    %362 = vmatpush1.msra.mxu0 0.0
    %363 = vmatprep.subr.mxu0 0.0
    %364 = vmatpush1.msra.mxu0 0.0
    %365 = vmatprep.subr.mxu0 0.0
    %366 = vmatpush1.msra.mxu0 0.0
    %367 = vmatprep.subr.mxu0 0.0
    %368 = vmatpush1.msra.mxu0 0.0
    %369 = vmatprep.subr.mxu0 0.0
    %370 = vmatpush1.msra.mxu0 0.0
    %371 = vmatprep.subr.mxu0 0.0
    %372 = vmatpush1.msra.mxu0 0.0
    %373 = vmatprep.subr.mxu0 0.0
    %374 = vmatpush1.msra.mxu0 0.0
    %375 = vmatprep.subr.mxu0 0.0
    %376 = vmatpush1.msra.mxu0 0.0
    %377 = vmatprep.subr.mxu0 0.0
    %378 = vmatpush1.msra.mxu0 0.0
    %379 = vmatprep.subr.mxu0 0.0
    %380 = vmatpush1.msra.mxu0 0.0
    %381 = vmatprep.subr.mxu0 0.0
    %382 = vmatpush1.msra.mxu0 0.0
    %383 = vmatprep.subr.mxu0 0.0
    %384 = vmatpush1.msra.mxu0 0.0
    %385 = vmatprep.subr.mxu0 0.0
    %386 = vmatpush1.msra.mxu0 0.0
    %387 = vmatprep.subr.mxu0 0.0
    %388 = vmatpush1.msra.mxu0 0.0
    %389 = vmatprep.subr.mxu0 0.0
    %390 = vmatpush1.msra.mxu0 0.0
    %391 = vmatprep.mubr.f32.mxu0 0.0
    %392 = vmatmul.mubr.f32.gmra.mrb[0].mxu0 %v322
    %v393 = vpop.f32.mrb[0].mxu0
    %v394 = vadd.f32 %v318, %v393
    %v395 = vpop.f32.mrb[0].mxu0
    %396 = vmatprep.mubr.f32.mxu0 0.0
    %397 = vmatmul.mubr.f32.gmra.mrb[0].mxu0 %v325
    %v398 = vpop.f32.mrb[0].mxu0
    %v399 = vadd.f32 %v318, %v398
    %v400 = vpop.f32.mrb[0].mxu0
    %401 = vdwg.mxu0
    %vm402 = vcmask 392192
    %403 = vst.msk [vmem:[#allocation2] sm:$0xff] %vm402, %v394
    %404 = vst.msk [vmem:[#allocation2 + $0x8] sm:$0xff] %vm402, %v399
    %v405 = vld [vmem:[%s9] sm:$0xff]
    %v406 = vld [vmem:[%s9 + $0x8] sm:$0xff]
    %v407 = vld [vmem:[%s10] sm:$0x1]
    %v409 = vlaneseq
    %v410 = vshrl.u32 %v409, 7
    %v411 = vsub.s32 0, %v410
    %v412 = vrot.slane %v407, %v411
    %414 = vmatprep.subr.mxu0 0.0
    %415 = vmatpush1.msra.mxu0 %v405
    %416 = vmatprep.subr.mxu0 0.0
    %417 = vmatpush1.msra.mxu0 %v406
    %418 = vmatprep.subr.mxu0 0.0
    %419 = vmatpush1.msra.mxu0 0.0
    %420 = vmatprep.subr.mxu0 0.0
    %421 = vmatpush1.msra.mxu0 0.0
    %422 = vmatprep.subr.mxu0 0.0
    %423 = vmatpush1.msra.mxu0 0.0
    %424 = vmatprep.subr.mxu0 0.0
    %425 = vmatpush1.msra.mxu0 0.0
    %426 = vmatprep.subr.mxu0 0.0
    %427 = vmatpush1.msra.mxu0 0.0
    %428 = vmatprep.subr.mxu0 0.0
    %429 = vmatpush1.msra.mxu0 0.0
    %430 = vmatprep.subr.mxu0 0.0
    %431 = vmatpush1.msra.mxu0 0.0
    %432 = vmatprep.subr.mxu0 0.0
    %433 = vmatpush1.msra.mxu0 0.0
    %434 = vmatprep.subr.mxu0 0.0
    %435 = vmatpush1.msra.mxu0 0.0
    %436 = vmatprep.subr.mxu0 0.0
    %437 = vmatpush1.msra.mxu0 0.0
    %438 = vmatprep.subr.mxu0 0.0
    %439 = vmatpush1.msra.mxu0 0.0
    %440 = vmatprep.subr.mxu0 0.0
    %441 = vmatpush1.msra.mxu0 0.0
    %442 = vmatprep.subr.mxu0 0.0
    %443 = vmatpush1.msra.mxu0 0.0
    %444 = vmatprep.subr.mxu0 0.0
    %445 = vmatpush1.msra.mxu0 0.0
    %446 = vmatprep.subr.mxu0 0.0
    %447 = vmatpush1.msra.mxu0 0.0
    %448 = vmatprep.subr.mxu0 0.0
    %449 = vmatpush1.msra.mxu0 0.0
    %450 = vmatprep.subr.mxu0 0.0
    %451 = vmatpush1.msra.mxu0 0.0
    %452 = vmatprep.subr.mxu0 0.0
    %453 = vmatpush1.msra.mxu0 0.0
    %454 = vmatprep.subr.mxu0 0.0
    %455 = vmatpush1.msra.mxu0 0.0
    %456 = vmatprep.subr.mxu0 0.0
    %457 = vmatpush1.msra.mxu0 0.0
    %458 = vmatprep.subr.mxu0 0.0
    %459 = vmatpush1.msra.mxu0 0.0
    %460 = vmatprep.subr.mxu0 0.0
    %461 = vmatpush1.msra.mxu0 0.0
    %462 = vmatprep.subr.mxu0 0.0
    %463 = vmatpush1.msra.mxu0 0.0
    %464 = vmatprep.subr.mxu0 0.0
    %465 = vmatpush1.msra.mxu0 0.0
    %466 = vmatprep.subr.mxu0 0.0
    %467 = vmatpush1.msra.mxu0 0.0
    %468 = vmatprep.subr.mxu0 0.0
    %469 = vmatpush1.msra.mxu0 0.0
    %470 = vmatprep.subr.mxu0 0.0
    %471 = vmatpush1.msra.mxu0 0.0
    %472 = vmatprep.subr.mxu0 0.0
    %473 = vmatpush1.msra.mxu0 0.0
    %474 = vmatprep.subr.mxu0 0.0
    %475 = vmatpush1.msra.mxu0 0.0
    %476 = vmatprep.subr.mxu0 0.0
    %477 = vmatpush1.msra.mxu0 0.0
    %478 = vmatprep.mubr.f32.mxu0 0.0
    %479 = vmatmul.mubr.f32.gmra.mrb[0].mxu0 %v322
    %v480 = vpop.f32.mrb[0].mxu0
    %v481 = vadd.f32 %v412, %v480
    %v482 = vpop.f32.mrb[0].mxu0
    %483 = vmatprep.mubr.f32.mxu0 0.0
    %484 = vmatmul.mubr.f32.gmra.mrb[0].mxu0 %v325
    %v485 = vpop.f32.mrb[0].mxu0
    %v486 = vadd.f32 %v412, %v485
    %v487 = vpop.f32.mrb[0].mxu0
    %488 = vdwg.mxu0
    %489 = vst.msk [vmem:[#allocation4] sm:$0xff] %vm402, %v481
    %490 = vst.msk [vmem:[#allocation4 + $0x8] sm:$0xff] %vm402, %v486
    // Predicated region
    $region46: #{tpu_custom_call.1} parent=1 // pred_check
      _
    $region47: #{tpu_custom_call.1} parent=1 // pred_check_branch
      %492 = sbr.rel (0) target = $region49
    $region48: #{tpu_custom_call.1} parent=1 // pred_region
      %s494 = ssub.s32 256, 256
      %495 = vsyncadd [#allocation3], %s494
      %s496 = sshll.u32 [#allocation2], 4
      %s497 = int_to_ptr.vmem [resolvable:$true] %s496
      %502 = dma.vmem_to_hbm [thread:$0]  %s497, 256, %s11, [#allocation3], 128, 128, 8
    $region49: #{tpu_custom_call.1} parent=1 // pred_fallthru
      _
    // Predicated region
    $region50: #{tpu_custom_call.1} parent=1 // pred_check
      _
    $region51: #{tpu_custom_call.1} parent=1 // pred_check_branch
      %504 = sbr.rel (0) target = $region53
    $region52: #{tpu_custom_call.1} parent=1 // pred_region
      %s506 = ssub.s32 256, 256
      %507 = vsyncadd [#allocation5], %s506
      %s508 = sshll.u32 [#allocation4], 4
      %s509 = int_to_ptr.vmem [resolvable:$true] %s508
      %514 = dma.vmem_to_hbm [thread:$0]  %s509, 256, %s12, [#allocation5], 128, 128, 8
    $region53: #{tpu_custom_call.1} parent=1 // pred_fallthru
      _
    // Predicated region
    $region54: #{tpu_custom_call.1} parent=1 // pred_check
      _
    $region55: #{tpu_custom_call.1} parent=1 // pred_check_branch
      %516 = sbr.rel (0) target = $region57
    $region56: #{tpu_custom_call.1} parent=1 // pred_region
      %517 = dma.done [#allocation3], 256
    $region57: #{tpu_custom_call.1} parent=1 // pred_fallthru
      _
    // Predicated region
    $region58: #{tpu_custom_call.1} parent=1 // pred_check
      _
    $region59: #{tpu_custom_call.1} parent=1 // pred_check_branch
      %519 = sbr.rel (0) target = $region61
    $region60: #{tpu_custom_call.1} parent=1 // pred_region
      %520 = dma.done [#allocation5], 256
    $region61: #{tpu_custom_call.1} parent=1 // pred_fallthru
      _
    %521 = vsyncpa [#allocation3], 1
    %522 = vsyncpa [#allocation5], 1

</llo_original>
